<compile_context>
chip_gen: v6e
topology: v6e:2x2x1
jax: 0.10.0
libtpu: 0.0.40
codegen_flags: <defaults>
</compile_context>

<pallas_src>
import functools

import jax
import jax.numpy as jnp
from jax.experimental import pallas as pl
from jax.experimental.pallas import tpu as pltpu


# --------------------------------------------------------------------------- #
# Host-side helpers
# --------------------------------------------------------------------------- #
def _round_up(x, m):
    return ((x + m - 1) // m) * m


def _plan_rows(batch, row_tile):
    """Pick a row tile (multiple of 8) and padded batch.

    Prefers >= 2 grid steps along the row axis so the "parallel" row dimension
    can be sharded across both TensorCores on v7x (no-op on v5e/v6e)."""
    bp8 = _round_up(max(int(batch), 1), 8)
    tm = min(int(row_tile), bp8)
    if tm == bp8 and bp8 >= 16:          # whole batch fits one tile -> split in two
        tm = _round_up(bp8 // 2, 8)
    padded = _round_up(bp8, tm)
    return tm, padded


def prepare_mtrnn_params(w_ih, w_hh, bias):
    """One-time weight prep (call OUTSIDE the jitted step).

    Returns:
      w_cat : (H + I, H) bf16, rows = [W_hh^T ; W_ih^T]  (matches [h | x] concat)
      b2d   : (1, H) f32
    """
    w_hh_t = jnp.asarray(w_hh, jnp.float32).T          # (H, H)
    w_ih_t = jnp.asarray(w_ih, jnp.float32).T          # (I, H)
    w_cat = jnp.concatenate([w_hh_t, w_ih_t], axis=0).astype(jnp.bfloat16)
    b2d = jnp.asarray(bias, jnp.float32).reshape(1, -1)
    return w_cat, b2d


# --------------------------------------------------------------------------- #
# Kernels
# --------------------------------------------------------------------------- #
def _mtrnn_cell_kernel(decay, mix, x_ref, h_ref, w_ref, b_ref, o_ref):
    """One fused MTRNN step on a (tm, .) row tile.

    new_h = decay*h + mix*tanh([h|x] @ [W_hh^T;W_ih^T] + b)
    Single bf16 MXU pass (K = H+I) with f32 accumulation; f32 epilogue."""
    h = h_ref[...]                                            # (tm, H) f32
    xh = jnp.concatenate([h, x_ref[...]], axis=-1)            # (tm, H+I) f32
    pre = jnp.dot(xh.astype(jnp.bfloat16), w_ref[...],
                  preferred_element_type=jnp.float32)
    pre = pre + b_ref[...]
    o_ref[...] = (decay * h + mix * jnp.tanh(pre)).astype(o_ref.dtype)


def _mtrnn_seq_kernel(decay, mix, x_ref, h0_ref, w_ref, b_ref, o_ref, h_sc):
    """Recurrence fused over the time grid axis: weights stay VMEM-resident,
    the hidden state is carried in a f32 VMEM scratch across grid steps."""
    @pl.when(pl.program_id(1) == 0)
    def _():
        h_sc[...] = h0_ref[...]

    h = h_sc[...]                                             # (tm, H) f32
    xh = jnp.concatenate([h, x_ref[...]], axis=-1)            # (tm, H+I) f32
    pre = jnp.dot(xh.astype(jnp.bfloat16), w_ref[...],
                  preferred_element_type=jnp.float32)
    pre = pre + b_ref[...]
    new_h = decay * h + mix * jnp.tanh(pre)
    h_sc[...] = new_h
    o_ref[...] = new_h.astype(o_ref.dtype)


# --------------------------------------------------------------------------- #
# Wrappers
# --------------------------------------------------------------------------- #
def mtrnn_cell(x, hx, w_cat, b2d, *, time_constant, row_tile=512):
    """MTRNNCell.forward (single step).

    x     : (B, input_size)  f32
    hx    : (B, hidden_size) f32
    w_cat : (hidden+input, hidden) bf16 from prepare_mtrnn_params
    b2d   : (1, hidden) f32
    returns new_h : (B, hidden) f32
    """
    B, I = x.shape
    H = hx.shape[1]
    assert w_cat.shape == (H + I, H) and b2d.shape == (1, H)
    decay = 1.0 - 1.0 / float(time_constant)
    mix = 1.0 / float(time_constant)

    tm, Bp = _plan_rows(B, row_tile)
    x_p = jnp.asarray(x, jnp.float32)
    h_p = jnp.asarray(hx, jnp.float32)
    if Bp != B:                                   # skip pad copies when aligned
        x_p = jnp.pad(x_p, ((0, Bp - B), (0, 0)))
        h_p = jnp.pad(h_p, ((0, Bp - B), (0, 0)))

    kernel = functools.partial(_mtrnn_cell_kernel, decay, mix)
    new_h = pl.pallas_call(
        kernel,
        out_shape=jax.ShapeDtypeStruct((Bp, H), jnp.float32),
        grid_spec=pltpu.PrefetchScalarGridSpec(
            num_scalar_prefetch=0,
            grid=(Bp // tm,),
            in_specs=[
                pl.BlockSpec((tm, I), lambda i: (i, 0)),      # x row tile
                pl.BlockSpec((tm, H), lambda i: (i, 0)),      # hx row tile
                pl.BlockSpec((H + I, H), lambda i: (0, 0)),   # stacked weights
                pl.BlockSpec((1, H), lambda i: (0, 0)),       # bias
            ],
            out_specs=pl.BlockSpec((tm, H), lambda i: (i, 0)),
        ),
        compiler_params=pltpu.CompilerParams(
            dimension_semantics=("parallel",),    # >=2 row steps -> both TCs on v7x
            vmem_limit_bytes=64 * 1024 * 1024,
        ),
    )(x_p, h_p, w_cat, b2d)
    return new_h if Bp == B else new_h[:B]


def mtrnn_sequence(xs, h0, w_cat, b2d, *, time_constant, row_tile=512):
    """Run the cell over a whole sequence in ONE pallas_call.

    xs : (T, B, input_size) f32, h0 : (B, hidden) f32
    returns hs : (T, B, hidden) f32 (hs[-1] is the final hidden state).
    Weights are fetched from HBM once per sequence (constant index_map)."""
    T, B, I = xs.shape
    H = h0.shape[1]
    assert w_cat.shape == (H + I, H) and b2d.shape == (1, H)
    decay = 1.0 - 1.0 / float(time_constant)
    mix = 1.0 / float(time_constant)

    tm, Bp = _plan_rows(B, row_tile)
    xs_p = jnp.asarray(xs, jnp.float32)
    h0_p = jnp.asarray(h0, jnp.float32)
    if Bp != B:
        xs_p = jnp.pad(xs_p, ((0, 0), (0, Bp - B), (0, 0)))
        h0_p = jnp.pad(h0_p, ((0, Bp - B), (0, 0)))

    kernel = functools.partial(_mtrnn_seq_kernel, decay, mix)
    hs = pl.pallas_call(
        kernel,
        out_shape=jax.ShapeDtypeStruct((T, Bp, H), jnp.float32),
        grid_spec=pltpu.PrefetchScalarGridSpec(
            num_scalar_prefetch=0,
            grid=(Bp // tm, T),                               # time axis last
            in_specs=[
                pl.BlockSpec((None, tm, I), lambda i, t: (t, i, 0)),  # x_t tile
                pl.BlockSpec((tm, H), lambda i, t: (i, 0)),           # h0 tile
                pl.BlockSpec((H + I, H), lambda i, t: (0, 0)),        # weights (resident)
                pl.BlockSpec((1, H), lambda i, t: (0, 0)),            # bias (resident)
            ],
            out_specs=pl.BlockSpec((None, tm, H), lambda i, t: (t, i, 0)),
            scratch_shapes=[pltpu.VMEM((tm, H), jnp.float32)],        # carried h
        ),
        compiler_params=pltpu.CompilerParams(
            dimension_semantics=("parallel", "arbitrary"),
            vmem_limit_bytes=64 * 1024 * 1024,
        ),
    )(xs_p, h0_p, w_cat, b2d)
    return hs if Bp == B else hs[:, :B]


# --------------------------------------------------------------------------- #
# Pure-JAX references (mirror the PyTorch forward)
# --------------------------------------------------------------------------- #
def mtrnn_cell_ref(x, hx, w_ih, w_hh, bias, *, time_constant):
    linear_i = x @ w_ih.T
    linear_h = hx @ w_hh.T
    return (1.0 - 1.0 / time_constant) * hx + (1.0 / time_constant) * jnp.tanh(
        linear_i + linear_h + bias)


def mtrnn_sequence_ref(xs, h0, w_ih, w_hh, bias, *, time_constant):
    h = h0
    outs = []
    for t in range(xs.shape[0]):
        h = mtrnn_cell_ref(xs[t], h, w_ih, w_hh, bias, time_constant=time_constant)
        outs.append(h)
    return jnp.stack(outs, axis=0)


# --------------------------------------------------------------------------- #
if __name__ == "__main__":
    key = jax.random.PRNGKey(0)
    k_x, k_h, k_wih, k_whh, k_b, k_seq = jax.random.split(key, 6)

    B = 16
    INPUT_SIZE = 64
    HIDDEN_SIZE = 128            # lane-dense output (multiple of 128)
    SEQ_LEN = 8
    TIME_CONSTANT = 4.0

    x = jax.random.normal(k_x, (B, INPUT_SIZE), jnp.float32)
    hx = jax.random.normal(k_h, (B, HIDDEN_SIZE), jnp.float32)
    w_ih = 0.1 * jax.random.normal(k_wih, (HIDDEN_SIZE, INPUT_SIZE), jnp.float32)
    w_hh = 0.1 * jax.random.normal(k_whh, (HIDDEN_SIZE, HIDDEN_SIZE), jnp.float32)
    bias = 0.01 * jax.random.normal(k_b, (HIDDEN_SIZE,), jnp.float32)
    xs = jax.random.normal(k_seq, (SEQ_LEN, B, INPUT_SIZE), jnp.float32)

    # Weight prep happens ONCE, outside the jitted per-step function.
    w_cat, b2d = prepare_mtrnn_params(w_ih, w_hh, bias)
    w_cat, b2d = jax.block_until_ready((w_cat, b2d))

    # ---- single-step cell (the module's forward) ---------------------------
    step = jax.jit(functools.partial(mtrnn_cell, time_constant=TIME_CONSTANT))
    new_h = step(x, hx, w_cat, b2d)
    jax.block_until_ready(new_h)

    assert new_h.shape == (B, HIDDEN_SIZE)
    ref = mtrnn_cell_ref(x, hx, w_ih, w_hh, bias, time_constant=TIME_CONSTANT)
    err = float(jnp.max(jnp.abs(new_h - ref)))
    assert jnp.allclose(new_h, ref, atol=2e-2, rtol=2e-2), err

    # ---- fused recurrence over SEQ_LEN steps (weight DMA amortized) --------
    seq = jax.jit(functools.partial(mtrnn_sequence, time_constant=TIME_CONSTANT))
    hs = seq(xs, hx, w_cat, b2d)
    jax.block_until_ready(hs)

    assert hs.shape == (SEQ_LEN, B, HIDDEN_SIZE)
    hs_ref = mtrnn_sequence_ref(xs, hx, w_ih, w_hh, bias, time_constant=TIME_CONSTANT)
    err_seq = float(jnp.max(jnp.abs(hs - hs_ref)))
    assert jnp.allclose(hs, hs_ref, atol=3e-2, rtol=3e-2), err_seq

    print("KERNEL_OK")
</pallas_src>

<mosaic_0001>
module attributes {stable_mosaic.version = 11 : i64} {
  func.func @_mtrnn_cell_kernel(%arg0: i32, %arg1: memref<8x64xf32, #tpu.memory_space<vmem>>, %arg2: memref<8x128xf32, #tpu.memory_space<vmem>>, %arg3: memref<192x128xbf16, #tpu.memory_space<vmem>>, %arg4: memref<1x128xf32, #tpu.memory_space<vmem>>, %arg5: memref<8x128xf32, #tpu.memory_space<vmem>>) attributes {dimension_semantics = [#tpu.dimension_semantics<parallel>], iteration_bounds = array<i64: 2>, scalar_prefetch = 0 : i64, scratch_operands = 0 : i64, tpu.core_type = #tpu.core_type<tc>, window_params = [{transform_indices = @transform_0, window_bounds = array<i64: 8, 64>}, {transform_indices = @transform_1, window_bounds = array<i64: 8, 128>}, {pipeline_mode = #tpu.pipeline_mode<synchronous>, transform_indices = @transform_2, window_bounds = array<i64: 192, 128>}, {pipeline_mode = #tpu.pipeline_mode<synchronous>, transform_indices = @transform_3, window_bounds = array<i64: 1, 128>}, {transform_indices = @transform_4, window_bounds = array<i64: 8, 128>}]} {
    %c0 = arith.constant 0 : index
    %c0_0 = arith.constant 0 : index
    %0 = vector.load %arg2[%c0, %c0_0] : memref<8x128xf32, #tpu.memory_space<vmem>>, vector<8x128xf32>
    %c0_1 = arith.constant 0 : index
    %c0_2 = arith.constant 0 : index
    %1 = vector.load %arg1[%c0_1, %c0_2] : memref<8x64xf32, #tpu.memory_space<vmem>>, vector<8x64xf32>
    %2 = tpu.concatenate %0, %1 in 1 : vector<8x128xf32>, vector<8x64xf32> -> vector<8x192xf32>
    %3 = arith.truncf %2 : vector<8x192xf32> to vector<8x192xbf16>
    %c0_3 = arith.constant 0 : index
    %c0_4 = arith.constant 0 : index
    %4 = vector.load %arg3[%c0_3, %c0_4] : memref<192x128xbf16, #tpu.memory_space<vmem>>, vector<192x128xbf16>
    %cst = arith.constant dense<0.000000e+00> : vector<8x128xf32>
    %5 = tpu.matmul %3, %4, %cst {dimension_numbers = #tpu.dot_dimension_numbers<[1], [0], [0], [1], [0, 0, 1, 1], [], []>} : vector<8x192xbf16>, vector<192x128xbf16>, vector<8x128xf32> -> vector<8x128xf32>
    %c0_5 = arith.constant 0 : index
    %c0_6 = arith.constant 0 : index
    %6 = vector.load %arg4[%c0_5, %c0_6] : memref<1x128xf32, #tpu.memory_space<vmem>>, vector<1x128xf32>
    %7 = vector.broadcast %6 : vector<1x128xf32> to vector<8x128xf32>
    %8 = arith.addf %5, %7 : vector<8x128xf32>
    %cst_7 = arith.constant 7.500000e-01 : f32
    %9 = vector.broadcast %cst_7 : f32 to vector<8x128xf32>
    %10 = arith.mulf %9, %0 : vector<8x128xf32>
    %11 = math.tanh %8 : vector<8x128xf32>
    %cst_8 = arith.constant 2.500000e-01 : f32
    %12 = vector.broadcast %cst_8 : f32 to vector<8x128xf32>
    %13 = arith.mulf %12, %11 : vector<8x128xf32>
    %14 = arith.addf %10, %13 : vector<8x128xf32>
    %c0_9 = arith.constant 0 : index
    %c0_10 = arith.constant 0 : index
    %15 = vector.load %arg5[%c0_9, %c0_10] : memref<8x128xf32, #tpu.memory_space<vmem>>, vector<8x128xf32>
    tpu.vector_store %arg5[%c0_9, %c0_10], %14 {strides = array<i32>} : memref<8x128xf32, #tpu.memory_space<vmem>>, vector<8x128xf32>,
    return
  }
  func.func @transform_0(%arg0: i32) -> (i32, i32) {
    %c0_i32 = arith.constant 0 : i32
    %c0_i32_0 = arith.constant 0 : i32
    return %arg0, %c0_i32 : i32, i32
  }
  func.func @transform_1(%arg0: i32) -> (i32, i32) {
    %c0_i32 = arith.constant 0 : i32
    %c0_i32_0 = arith.constant 0 : i32
    return %arg0, %c0_i32 : i32, i32
  }
  func.func @transform_2(%arg0: i32) -> (i32, i32) {
    %c0_i32 = arith.constant 0 : i32
    %c0_i32_0 = arith.constant 0 : i32
    %c0_i32_1 = arith.constant 0 : i32
    return %c0_i32, %c0_i32_0 : i32, i32
  }
  func.func @transform_3(%arg0: i32) -> (i32, i32) {
    %c0_i32 = arith.constant 0 : i32
    %c0_i32_0 = arith.constant 0 : i32
    %c0_i32_1 = arith.constant 0 : i32
    return %c0_i32, %c0_i32_0 : i32, i32
  }
  func.func @transform_4(%arg0: i32) -> (i32, i32) {
    %c0_i32 = arith.constant 0 : i32
    %c0_i32_0 = arith.constant 0 : i32
    return %arg0, %c0_i32 : i32, i32
  }
}

</mosaic_0001>

<llo_original>
// kernel: mtrnn_cell.1
$region0: #{mtrnn_cell.1}
  #allocation0 [shape = 'u32[]', space=smem, size = 0x4, offset = 0x4, fixed_abs, tag = 'smem constant byte address 0x4 - core index']
  #allocation1 [shape = 'u32[144,128]{1,0:T(1,128)}', space=vmem, size = 0x12000, scoped, tag = 'internal scratch']
  %s0 = inlined_call_operand.hbm [shape: f32[16,64], index: 0, kind: input, shape index: {}]
  %s1 = inlined_call_operand.hbm [shape: f32[16,128], index: 1, kind: input, shape index: {}]
  %s2 = inlined_call_operand.hbm [shape: bf16[192,128], index: 2, kind: input, shape index: {}]
  %s3 = inlined_call_operand.vmem [shape: f32[1,128], index: 3, kind: input, shape index: {}]
  %s4 = inlined_call_operand.hbm [shape: f32[16,128], index: 4, kind: output, shape index: {}]
  %s5 = sld [smem:[#allocation0]]
  $region61: #{mtrnn_cell.1} parent=0
    _
  %s7 = ssub.s32 1, %s5
  %s8 = scalar_select 0, %s7, %s5
  $region1: #{mtrnn_cell.1} parent=0
    #allocation2 [shape = 'u8[8192]{0}', space=vmem, size = 0x2000, scoped, tag = 'input window, operand 0']
    #allocation3 [shape = 's32[2]{0}', space=sflag, size = 0x8, scoped, tag = 'scoped memory for mtrnn_cell.1']
    #allocation4 [shape = 's32[2]{0}', space=sflag, size = 0x8, scoped, tag = 'scoped memory for mtrnn_cell.1']
    #allocation5 [shape = 'u8[8192]{0}', space=vmem, size = 0x2000, scoped, tag = 'input window, operand 1']
    #allocation6 [shape = 's32[2]{0}', space=sflag, size = 0x8, scoped, tag = 'scoped memory for mtrnn_cell.1']
    #allocation7 [shape = 'u8[49152]{0}', space=vmem, size = 0xc000, scoped, tag = 'input window, operand 2, single buffered']
    #allocation8 [shape = 'u8[8192]{0}', space=vmem, size = 0x2000, scoped, tag = 'output window, operand 0']
    %9 = vsyncpa [#allocation3], 0
    %s10 = scalar_lea.sflag [#allocation3], 1
    %11 = vsyncpa %s10, 0
    %12 = vsyncpa [#allocation6], 0
    %s13 = scalar_lea.sflag [#allocation6], 1
    %14 = vsyncpa %s13, 0
    %15 = vsyncpa [#allocation4], 0
    %s16 = scalar_lea.sflag [#allocation4], 1
    %17 = vsyncpa %s16, 0
    loop: start=0, step=1, limit=4
    $region2: #{mtrnn_cell.1} parent=1 // loop_pre_header
      _
    $region3: #{mtrnn_cell.1} parent=1 // loop_header
      %s19 = sphi 0, %s23
      %p20 = scmp.ge.s32.totalorder %s19, 4
      %s29 = sphi 0, %s31
      %s32 = sphi 0, %s29
      %s33 = sphi 0, %s32
      %s49 = sphi 0, %s33
      %s55 = sphi 0, %s57
      %s58 = sphi 0, %s55
      %s59 = sphi 0, %s58
      %s75 = sphi 0, %s59
      %s79 = sphi 0, %s79
      %s81 = sphi 0, %s79
      %s82 = sphi 0, %s81
      %s96 = sphi 0, %s82
      %s100 = sphi 0, %s100
      %s102 = sphi 0, %s100
      %s103 = sphi 0, %s102
      %s117 = sphi 0, %s103
      %s123 = sphi 0, %s125
      %s126 = sphi 0, %s123
      %s127 = sphi 0, %s126
      %s143 = sphi 0, %s127
    $region4: #{mtrnn_cell.1} parent=1 // loop_header_branch
      %22 = sbr.rel (%p20) target = $region8
    $region5: #{mtrnn_cell.1} parent=1 // loop_body
      %s24 = ssub.s32 %s19, 1
      %s25 = ssub.s32 %s19, 2
      %s26 = sadd.s32 %s19, 1
      %s27 = ssub.s32 %s19, %s26
      %p28 = scmp.eq.s32.totalorder %s27, 0
      %s30 = sadd.s32 %s29, 1
      %s31 = scalar_select %p28, %s29, %s30
      %p34 = pneg %p28
      %p35 = scmp.eq.s32.totalorder %s19, 1
      %p36 = por %p34, %p35
      %p37 = scmp.ne.s32.totalorder %s29, %s32
      %p38 = scmp.eq.s32.totalorder %s19, 0
      %p39 = por %p37, %p38
      %p40 = scmp.ne.s32.totalorder %s29, %s32
      %p41 = scmp.eq.s32.totalorder %s24, 1
      %p42 = por %p40, %p41
      %p43 = scmp.ne.s32.totalorder %s32, %s33
      %p44 = scmp.eq.s32.totalorder %s24, 0
      %p45 = por %p43, %p44
      %p46 = scmp.ne.s32.totalorder %s32, %s33
      %p47 = scmp.eq.s32.totalorder %s25, 1
      %p48 = por %p46, %p47
      %p50 = scmp.ne.s32.totalorder %s33, %s49
      %p51 = scmp.eq.s32.totalorder %s25, 0
      %p52 = por %p50, %p51
      %s53 = ssub.s32 %s19, %s26
      %p54 = scmp.eq.s32.totalorder %s53, 0
      %s56 = sadd.s32 %s55, 1
      %s57 = scalar_select %p54, %s55, %s56
      %p60 = pneg %p54
      %p61 = scmp.eq.s32.totalorder %s19, 1
      %p62 = por %p60, %p61
      %p63 = scmp.ne.s32.totalorder %s55, %s58
      %p64 = scmp.eq.s32.totalorder %s19, 0
      %p65 = por %p63, %p64
      %p66 = scmp.ne.s32.totalorder %s55, %s58
      %p67 = scmp.eq.s32.totalorder %s24, 1
      %p68 = por %p66, %p67
      %p69 = scmp.ne.s32.totalorder %s58, %s59
      %p70 = scmp.eq.s32.totalorder %s24, 0
      %p71 = por %p69, %p70
      %p72 = scmp.ne.s32.totalorder %s58, %s59
      %p73 = scmp.eq.s32.totalorder %s25, 1
      %p74 = por %p72, %p73
      %p76 = scmp.ne.s32.totalorder %s59, %s75
      %p77 = scmp.eq.s32.totalorder %s25, 0
      %p78 = por %p76, %p77
      %s80 = sadd.s32 %s79, 1
      %p83 = scmp.eq.s32.totalorder %s19, 1
      %p84 = scmp.ne.s32.totalorder %s79, %s81
      %p85 = scmp.eq.s32.totalorder %s19, 0
      %p86 = por %p84, %p85
      %p87 = scmp.ne.s32.totalorder %s79, %s81
      %p88 = scmp.eq.s32.totalorder %s24, 1
      %p89 = por %p87, %p88
      %p90 = scmp.ne.s32.totalorder %s81, %s82
      %p91 = scmp.eq.s32.totalorder %s24, 0
      %p92 = por %p90, %p91
      %p93 = scmp.ne.s32.totalorder %s81, %s82
      %p94 = scmp.eq.s32.totalorder %s25, 1
      %p95 = por %p93, %p94
      %p97 = scmp.ne.s32.totalorder %s82, %s96
      %p98 = scmp.eq.s32.totalorder %s25, 0
      %p99 = por %p97, %p98
      %s101 = sadd.s32 %s100, 1
      %p104 = scmp.eq.s32.totalorder %s19, 1
      %p105 = scmp.ne.s32.totalorder %s100, %s102
      %p106 = scmp.eq.s32.totalorder %s19, 0
      %p107 = por %p105, %p106
      %p108 = scmp.ne.s32.totalorder %s100, %s102
      %p109 = scmp.eq.s32.totalorder %s24, 1
      %p110 = por %p108, %p109
      %p111 = scmp.ne.s32.totalorder %s102, %s103
      %p112 = scmp.eq.s32.totalorder %s24, 0
      %p113 = por %p111, %p112
      %p114 = scmp.ne.s32.totalorder %s102, %s103
      %p115 = scmp.eq.s32.totalorder %s25, 1
      %p116 = por %p114, %p115
      %p118 = scmp.ne.s32.totalorder %s103, %s117
      %p119 = scmp.eq.s32.totalorder %s25, 0
      %p120 = por %p118, %p119
      %s121 = ssub.s32 %s19, %s26
      %p122 = scmp.eq.s32.totalorder %s121, 0
      %s124 = sadd.s32 %s123, 1
      %s125 = scalar_select %p122, %s123, %s124
      %p128 = pneg %p122
      %p129 = scmp.eq.s32.totalorder %s19, 1
      %p130 = por %p128, %p129
      %p131 = scmp.ne.s32.totalorder %s123, %s126
      %p132 = scmp.eq.s32.totalorder %s19, 0
      %p133 = por %p131, %p132
      %p134 = scmp.ne.s32.totalorder %s123, %s126
      %p135 = scmp.eq.s32.totalorder %s24, 1
      %p136 = por %p134, %p135
      %p137 = scmp.ne.s32.totalorder %s126, %s127
      %p138 = scmp.eq.s32.totalorder %s24, 0
      %p139 = por %p137, %p138
      %p140 = scmp.ne.s32.totalorder %s126, %s127
      %p141 = scmp.eq.s32.totalorder %s25, 1
      %p142 = por %p140, %p141
      %p144 = scmp.ne.s32.totalorder %s127, %s143
      %p145 = scmp.eq.s32.totalorder %s25, 0
      %p146 = por %p144, %p145
      %p147 = scmp.le.s32.totalorder 1, %s19
      %p148 = scmp.lt.s32.totalorder %s19, 3
      %p149 = pnand %p147, %p148
      %p150 = pneg %p149
      // Predicated region
      $region9: #{mtrnn_cell.1} parent=5 // pred_check
        _
      $region10: #{mtrnn_cell.1} parent=5 // pred_check_branch
        %152 = sbr.rel (%p149) target = $region12
      $region11: #{mtrnn_cell.1} parent=5 // pred_region
        %s153 = ssub.s32 %s19, 1
        // Predicated region
        $region13: #{mtrnn_cell.1} parent=11 // pred_check
          %p154 = pneg %p92
        $region14: #{mtrnn_cell.1} parent=11 // pred_check_branch
          %156 = sbr.rel (%p154) target = $region16
        $region15: #{mtrnn_cell.1} parent=11 // pred_region
          %s158 = ssub.s32 1536, 1536
          %159 = vsyncadd [#allocation6], %s158
          %s160 = sshll.u32 [#allocation7], 4
          %s161 = int_to_ptr.vmem [resolvable:$true] %s160
          %166 = dma.hbm_to_vmem [thread:$0]  %s2, 1536, %s161, [#allocation6], 64, 64, 4
        $region16: #{mtrnn_cell.1} parent=11 // pred_fallthru
          _
        // Predicated region
        $region17: #{mtrnn_cell.1} parent=11 // pred_check
          %p167 = pneg %p113
        $region18: #{mtrnn_cell.1} parent=11 // pred_check_branch
          %169 = sbr.rel (%p167) target = $region20
        $region19: #{mtrnn_cell.1} parent=11 // pred_region
          _
        $region20: #{mtrnn_cell.1} parent=11 // pred_fallthru
          _
      $region12: #{mtrnn_cell.1} parent=5 // pred_fallthru
        _
      %p170 = scmp.lt.s32.totalorder %s19, 2
      // Predicated region
      $region21: #{mtrnn_cell.1} parent=5 // pred_check
        %p171 = pneg %p170
      $region22: #{mtrnn_cell.1} parent=5 // pred_check_branch
        %173 = sbr.rel (%p171) target = $region24
      $region23: #{mtrnn_cell.1} parent=5 // pred_region
        // Predicated region
        $region25: #{mtrnn_cell.1} parent=23 // pred_check
          %p174 = pneg %p39
        $region26: #{mtrnn_cell.1} parent=23 // pred_check_branch
          %176 = sbr.rel (%p174) target = $region28
        $region27: #{mtrnn_cell.1} parent=23 // pred_region
          %s177 = sand.u32 %s29, 1
          %s178 = scalar_lea.sflag [#allocation3], %s177
          %s179 = sand.u32 %s29, 1
          %s180 = smul.addr %s179, 8
          %s181 = scalar_lea.vmem [#allocation2], %s180
          %s183 = ssub.s32 128, 128
          %184 = vsyncadd %s178, %s183
          %s185 = smul.addr %s19, 128
          %s186 = scalar_lea.hbm %s0, %s185
          %s188 = sshll.u32 %s181, 4
          %s189 = int_to_ptr.vmem [resolvable:$true] %s188
          %191 = dma.hbm_to_vmem [thread:$0]  %s186, 128, %s189, %s178
        $region28: #{mtrnn_cell.1} parent=23 // pred_fallthru
          _
        // Predicated region
        $region29: #{mtrnn_cell.1} parent=23 // pred_check
          %p192 = pneg %p65
        $region30: #{mtrnn_cell.1} parent=23 // pred_check_branch
          %194 = sbr.rel (%p192) target = $region32
        $region31: #{mtrnn_cell.1} parent=23 // pred_region
          %s195 = sand.u32 %s19, 1
          %s196 = scalar_lea.sflag [#allocation6], %s195
          %s197 = sand.u32 %s55, 1
          %s198 = smul.addr %s197, 8
          %s199 = scalar_lea.vmem [#allocation5], %s198
          %s201 = ssub.s32 128, 128
          %202 = vsyncadd %s196, %s201
          %s203 = smul.addr %s19, 128
          %s204 = scalar_lea.hbm %s1, %s203
          %s206 = sshll.u32 %s199, 4
          %s207 = int_to_ptr.vmem [resolvable:$true] %s206
          %209 = dma.hbm_to_vmem [thread:$0]  %s204, 128, %s207, %s196
        $region32: #{mtrnn_cell.1} parent=23 // pred_fallthru
          _
      $region24: #{mtrnn_cell.1} parent=5 // pred_fallthru
        _
      %p210 = scmp.le.s32.totalorder 1, %s19
      %p211 = scmp.lt.s32.totalorder %s19, 3
      %p212 = pnand %p210, %p211
      %p213 = pneg %p212
      // Predicated region
      $region33: #{mtrnn_cell.1} parent=5 // pred_check
        _
      $region34: #{mtrnn_cell.1} parent=5 // pred_check_branch
        %215 = sbr.rel (%p212) target = $region36
      $region35: #{mtrnn_cell.1} parent=5 // pred_region
        %s216 = ssub.s32 %s19, 1
        %s217 = sand.u32 %s32, 1
        %s218 = scalar_lea.sflag [#allocation3], %s217
        %s219 = sand.u32 %s32, 1
        %s220 = smul.addr %s219, 8
        %s221 = scalar_lea.vmem [#allocation2], %s220
        // Predicated region
        $region37: #{mtrnn_cell.1} parent=35 // pred_check
          %p222 = pneg %p45
        $region38: #{mtrnn_cell.1} parent=35 // pred_check_branch
          %224 = sbr.rel (%p222) target = $region40
        $region39: #{mtrnn_cell.1} parent=35 // pred_region
          %225 = dma.done %s218, 128
        $region40: #{mtrnn_cell.1} parent=35 // pred_fallthru
          _
        %s226 = sand.u32 %s24, 1
        %s227 = scalar_lea.sflag [#allocation6], %s226
        %s228 = sand.u32 %s58, 1
        %s229 = smul.addr %s228, 8
        %s230 = scalar_lea.vmem [#allocation5], %s229
        // Predicated region
        $region41: #{mtrnn_cell.1} parent=35 // pred_check
          %p231 = pneg %p71
        $region42: #{mtrnn_cell.1} parent=35 // pred_check_branch
          %233 = sbr.rel (%p231) target = $region44
        $region43: #{mtrnn_cell.1} parent=35 // pred_region
          %234 = dma.done %s227, 128
        $region44: #{mtrnn_cell.1} parent=35 // pred_fallthru
          _
        // Predicated region
        $region45: #{mtrnn_cell.1} parent=35 // pred_check
          %p235 = pneg %p92
        $region46: #{mtrnn_cell.1} parent=35 // pred_check_branch
          %237 = sbr.rel (%p235) target = $region48
        $region47: #{mtrnn_cell.1} parent=35 // pred_region
          %238 = dma.done [#allocation6], 1536
        $region48: #{mtrnn_cell.1} parent=35 // pred_fallthru
          _
        %s239 = sand.u32 %s32, 1
        %s240 = scalar_lea.sflag [#allocation3], %s239
        %s241 = sand.u32 %s32, 1
        %s242 = smul.addr %s241, 8
        %s243 = scalar_lea.vmem [#allocation2], %s242
        %p244 = pneg %p45
        %p245 = pneg %p42
        %s246 = sand.u32 %s24, 1
        %s247 = scalar_lea.sflag [#allocation6], %s246
        %s248 = sand.u32 %s58, 1
        %s249 = smul.addr %s248, 8
        %s250 = scalar_lea.vmem [#allocation5], %s249
        %p251 = pneg %p71
        %p252 = pneg %p68
        %p253 = pneg %p92
        %p254 = pneg %p89
        %p255 = pneg %p113
        %p256 = pneg %p110
        %p257 = pneg %p139
        %p258 = pneg %p136
        %s259 = sand.u32 %s126, 1
        %s260 = scalar_lea.sflag [#allocation4], %s259
        %s261 = sand.u32 %s126, 1
        %s262 = smul.addr %s261, 8
        %s263 = scalar_lea.vmem [#allocation8], %s262
        %v265 = vld [vmem:[%s230] sm:$0xff]
        %v266 = vld [vmem:[%s221] sm:$0xff]
        %v267 = vpack.c.bf16 %v265, %v265
        %v268 = vpack.c.bf16 %v266, %v266
        %v269 = vld [vmem:[#allocation7] sm:$0xf]
        %v270 = vld [vmem:[#allocation7 + $0x4] sm:$0xf]
        %v271 = vld [vmem:[#allocation7 + $0x8] sm:$0xf]
        %v272 = vld [vmem:[#allocation7 + $0xc] sm:$0xf]
        %v273 = vld [vmem:[#allocation7 + $0x10] sm:$0xf]
        %v274 = vld [vmem:[#allocation7 + $0x14] sm:$0xf]
        %v275 = vld [vmem:[#allocation7 + $0x18] sm:$0xf]
        %v276 = vld [vmem:[#allocation7 + $0x1c] sm:$0xf]
        %v277 = vld [vmem:[#allocation7 + $0x20] sm:$0xf]
        %v278 = vld [vmem:[#allocation7 + $0x24] sm:$0xf]
        %v279 = vld [vmem:[#allocation7 + $0x28] sm:$0xf]
        %v280 = vld [vmem:[#allocation7 + $0x2c] sm:$0xf]
        %v281 = vld [vmem:[#allocation7 + $0x30] sm:$0xf]
        %v282 = vld [vmem:[#allocation7 + $0x34] sm:$0xf]
        %v283 = vld [vmem:[#allocation7 + $0x38] sm:$0xf]
        %v284 = vld [vmem:[#allocation7 + $0x3c] sm:$0xf]
        %v285 = vld [vmem:[#allocation7 + $0x40] sm:$0xf]
        %v286 = vld [vmem:[#allocation7 + $0x44] sm:$0xf]
        %v287 = vld [vmem:[#allocation7 + $0x48] sm:$0xf]
        %v288 = vld [vmem:[#allocation7 + $0x4c] sm:$0xf]
        %v289 = vld [vmem:[#allocation7 + $0x50] sm:$0xf]
        %v290 = vld [vmem:[#allocation7 + $0x54] sm:$0xf]
        %v291 = vld [vmem:[#allocation7 + $0x58] sm:$0xf]
        %v292 = vld [vmem:[#allocation7 + $0x5c] sm:$0xf]
        %v293 = vld [vmem:[%s3] sm:$0x1]
        %v295 = vlaneseq
        %v296 = vshrl.u32 %v295, 7
        %v297 = vsub.s32 0, %v296
        %v298 = vrot.slane %v293, %v297
        %v324 = vunpack.c.l.b16 %v269
        %v325 = vunpack.c.l.b16 %v270
        %v326 = vunpack.c.l.b16 %v271
        %v327 = vunpack.c.l.b16 %v272
        %v328 = vunpack.c.l.b16 %v273
        %v329 = vunpack.c.l.b16 %v274
        %v330 = vunpack.c.l.b16 %v275
        %v331 = vunpack.c.l.b16 %v276
        %v332 = vunpack.c.l.b16 %v277
        %v333 = vunpack.c.l.b16 %v278
        %v334 = vunpack.c.l.b16 %v279
        %v335 = vunpack.c.l.b16 %v280
        %v336 = vunpack.c.l.b16 %v281
        %v337 = vunpack.c.l.b16 %v282
        %v338 = vunpack.c.l.b16 %v283
        %v339 = vunpack.c.l.b16 %v284
        %v340 = vunpack.c.l.b16 %v285
        %v341 = vunpack.c.l.b16 %v286
        %v342 = vunpack.c.l.b16 %v287
        %v343 = vunpack.c.l.b16 %v288
        %v344 = vunpack.c.l.b16 %v289
        %v345 = vunpack.c.l.b16 %v290
        %v346 = vunpack.c.l.b16 %v291
        %v347 = vunpack.c.l.b16 %v292
        %v348 = vpack.c.b16 %v325, %v324
        %v349 = vpack.c.b16 %v327, %v326
        %v350 = vpack.c.b16 %v329, %v328
        %v351 = vpack.c.b16 %v331, %v330
        %v352 = vpack.c.b16 %v333, %v332
        %v353 = vpack.c.b16 %v335, %v334
        %v354 = vpack.c.b16 %v337, %v336
        %v355 = vpack.c.b16 %v339, %v338
        %v356 = vpack.c.b16 %v341, %v340
        %v357 = vpack.c.b16 %v343, %v342
        %v358 = vpack.c.b16 %v345, %v344
        %v359 = vpack.c.b16 %v347, %v346
        %vm372 = vcmask 523264
        %v374 = vsel %vm372, %v268, 0
        %376 = vmatprep.subr.bf16.mxu0 0
        %377 = vmatpush1.bf16.msra.mxu0 %v355
        %378 = vmatprep.subr.bf16.mxu0 0
        %379 = vmatpush1.bf16.msra.mxu0 %v354
        %380 = vmatprep.subr.bf16.mxu0 0
        %381 = vmatpush1.bf16.msra.mxu0 %v353
        %382 = vmatprep.subr.bf16.mxu0 0
        %383 = vmatpush1.bf16.msra.mxu0 %v352
        %384 = vmatprep.subr.bf16.mxu0 0
        %385 = vmatpush1.bf16.msra.mxu0 %v351
        %386 = vmatprep.subr.bf16.mxu0 0
        %387 = vmatpush1.bf16.msra.mxu0 %v350
        %388 = vmatprep.subr.bf16.mxu0 0
        %389 = vmatpush1.bf16.msra.mxu0 %v349
        %390 = vmatprep.subr.bf16.mxu0 0
        %391 = vmatpush1.bf16.msra.mxu0 %v348
        %392 = vmatprep.subr.bf16.mxu0 0
        %393 = vmatpush2.bf16.msra.mxu0 0
        %394 = vmatprep.subr.bf16.mxu0 0
        %395 = vmatpush2.bf16.msra.mxu0 0
        %396 = vmatprep.subr.bf16.mxu0 0
        %397 = vmatpush2.bf16.msra.mxu0 0
        %398 = vmatprep.subr.bf16.mxu0 0
        %399 = vmatpush2.bf16.msra.mxu0 0
        %400 = vmatprep.subr.bf16.mxu0 0
        %401 = vmatpush2.bf16.msra.mxu0 %v359
        %402 = vmatprep.subr.bf16.mxu0 0
        %403 = vmatpush2.bf16.msra.mxu0 %v358
        %404 = vmatprep.subr.bf16.mxu0 0
        %405 = vmatpush2.bf16.msra.mxu0 %v357
        %406 = vmatprep.subr.bf16.mxu0 0
        %407 = vmatpush2.bf16.msra.mxu0 %v356
        %408 = vmatprep.mubr.bf16.mxu0 %v374
        %409 = vmatmul.mubr.bf16.gmra.mxu0 %v267
        %v410 = vpop.f32.mrf.mxu0
        %v411 = vadd.f32 %v298, %v410
        %v412 = vpop.f32.mrf.mxu0
        %v413 = vpop.f32.mrf.mxu0
        %v414 = vpop.f32.mrf.mxu0
        %415 = vdwg.mxu0
        %v416 = vmul.f32 %v265, 0.75
        %v417 = vtanh.pop %v411
        %v418 = vmul.f32 %v417, 0.25
        %v419 = vadd.f32 %v416, %v418
        %420 = vst [vmem:[%s263] sm:$0xff] %v419
        %s421 = sand.u32 %s126, 1
        %s422 = scalar_lea.sflag [#allocation4], %s421
        %s423 = sand.u32 %s126, 1
        %s424 = smul.addr %s423, 8
        %s425 = scalar_lea.vmem [#allocation8], %s424
        // Predicated region
        $region49: #{mtrnn_cell.1} parent=35 // pred_check
          %p426 = pneg %p136
        $region50: #{mtrnn_cell.1} parent=35 // pred_check_branch
          %428 = sbr.rel (%p426) target = $region52
        $region51: #{mtrnn_cell.1} parent=35 // pred_region
          %s430 = ssub.s32 128, 128
          %431 = vsyncadd %s422, %s430
          %s432 = smul.addr %s24, 128
          %s433 = scalar_lea.hbm %s4, %s432
          %s435 = sshll.u32 %s425, 4
          %s436 = int_to_ptr.vmem [resolvable:$true] %s435
          %438 = dma.vmem_to_hbm [thread:$0]  %s436, 128, %s433, %s422
        $region52: #{mtrnn_cell.1} parent=35 // pred_fallthru
          _
      $region36: #{mtrnn_cell.1} parent=5 // pred_fallthru
        _
      %p439 = scmp.le.s32.totalorder 2, %s19
      // Predicated region
      $region53: #{mtrnn_cell.1} parent=5 // pred_check
        %p440 = pneg %p439
      $region54: #{mtrnn_cell.1} parent=5 // pred_check_branch
        %442 = sbr.rel (%p440) target = $region56
      $region55: #{mtrnn_cell.1} parent=5 // pred_region
        %s443 = ssub.s32 %s19, 2
        // Predicated region
        $region57: #{mtrnn_cell.1} parent=55 // pred_check
          %p444 = pneg %p142
        $region58: #{mtrnn_cell.1} parent=55 // pred_check_branch
          %446 = sbr.rel (%p444) target = $region60
        $region59: #{mtrnn_cell.1} parent=55 // pred_region
          %s447 = sand.u32 %s127, 1
          %s448 = scalar_lea.sflag [#allocation4], %s447
          %s449 = sand.u32 %s127, 1
          %s450 = smul.addr %s449, 8
          %s451 = scalar_lea.vmem [#allocation8], %s450
          %452 = dma.done %s448, 128
        $region60: #{mtrnn_cell.1} parent=55 // pred_fallthru
          _
      $region56: #{mtrnn_cell.1} parent=5 // pred_fallthru
        _
    $region6: #{mtrnn_cell.1} parent=1 // loop_footer
      %s23 = sadd.s32 1, %s19
    $region7: #{mtrnn_cell.1} parent=1 // loop_footer_branch
      %18 = sbr.rel target = $region3
    $region8: #{mtrnn_cell.1} parent=1 // loop_exit
      _
    %453 = vsyncpa [#allocation3], 1
    %s454 = scalar_lea.sflag [#allocation3], 1
    %455 = vsyncpa %s454, 1
    %456 = vsyncpa [#allocation6], 1
    %s457 = scalar_lea.sflag [#allocation6], 1
    %458 = vsyncpa %s457, 1
    %459 = vsyncpa [#allocation4], 1
    %s460 = scalar_lea.sflag [#allocation4], 1
    %461 = vsyncpa %s460, 1

</llo_original>
